<compile_context>
chip_gen: v6e
topology: v6e:2x2x1
jax: 0.10.0
libtpu: 0.0.40
codegen_flags: <defaults>
</compile_context>

<pallas_src>
import jax
import jax.numpy as jnp
from jax.experimental import pallas as pl
from jax.experimental.pallas import tpu as pltpu


_LANES = 128  # TPU lane width: keep the kernel's last dim a multiple of this.


def _round_up(x, m):
    return ((x + m - 1) // m) * m


def _sublane_multiple(itemsize):
    # Native sublane packing: 8 rows for 4-byte, 16 for 2-byte, 32 for 1-byte.
    return max(8, 32 // max(itemsize, 1))


def _target_block_bytes():
    """Per-block byte budget (generation-aware).

    The copy is pure HBM streaming, so the only in-kernel lever is amortizing
    the ~0.35 us per-grid-step overhead with bigger blocks, capped by the
    scoped-VMEM default (in + out, each double-buffered => 4x the block size).
    """
    try:
        kind = jax.devices()[0].device_kind.lower()
    except Exception:
        kind = ""
    if "v6" in kind or "v7" in kind:
        # v6e/v7x: 1.4-3.2 TB/s HBM -> 4 MiB blocks. 4 MiB * 2 bufs * (in+out)
        # = 16 MiB, under the 32 MiB scoped-VMEM default on both.
        return 4 << 20
    # v5e (16 MiB scoped default) and anything unrecognized: 2 MiB blocks
    # (8 MiB total with double-buffering) -- already ~85%+ of HBM roofline.
    return 2 << 20


def _pick_row_tile(rows, row_bytes, itemsize):
    """Rows per block: byte-budget sized, sublane-aligned, and >= 2 grid steps
    when the input is big enough for pipelining / dual-TC sharding to matter."""
    sub = _sublane_multiple(itemsize)
    if rows <= 8 * sub:
        # Tiny input: one full-extent block (always layout-legal); pipelining
        # and a second grid step would be pure overhead here.
        return rows
    budget = max(sub, (_target_block_bytes() // max(row_bytes, 1)) // sub * sub)
    # Cap at half the rows (rounded up to a sublane multiple) so the grid has
    # at least 2 steps -> v7x's second TensorCore / DMA engines participate.
    half = _round_up(pl.cdiv(rows, 2), sub)
    return min(budget, half)


def _copy_kernel(x_ref, o_ref):
    # TODO(synk): BaseTaskHead.forward is abstract in PyTorch (raises
    # NotImplementedError); a concrete subclass (e.g. an edge-scoring MLP)
    # replaces this body with real compute (f32 VMEM accumulator scratch,
    # reduction axis last in the grid marked "arbitrary", MXU-sized tiles).
    o_ref[...] = x_ref[...]


def _materialized_identity(x):
    """Tiled, pipelined, lane-dense Pallas copy of a [N, H] array."""
    n, h = x.shape
    itemsize = x.dtype.itemsize
    total = n * h
    cost = pl.CostEstimate(flops=0, transcendentals=0,
                           bytes_accessed=2 * total * itemsize)

    if total % _LANES == 0:
        # Lane-dense path: view the (contiguous, row-major) [N, H] buffer as
        # [N*H/128, 128] (a free view for row-major inputs) so every store is
        # a full-lane unmasked vst, then tile the row axis so the BlockSpec
        # pipeline double-buffers the in/out DMAs.
        rows = total // _LANES
        tm = _pick_row_tile(rows, _LANES * itemsize, itemsize)
        x2 = x.reshape(rows, _LANES)
        out = pl.pallas_call(
            _copy_kernel,
            out_shape=jax.ShapeDtypeStruct((rows, _LANES), x.dtype),
            grid=(pl.cdiv(rows, tm),),
            in_specs=[pl.BlockSpec((tm, _LANES), lambda i: (i, 0))],
            out_specs=pl.BlockSpec((tm, _LANES), lambda i: (i, 0)),
            input_output_aliases={0: 0},
            cost_estimate=cost,
            compiler_params=pltpu.CompilerParams(
                # Independent row tiles -> shard across both TensorCores on
                # v7x; harmless on single-TC v5e/v6e.
                dimension_semantics=("parallel",),
            ),
        )(x2)
        return out.reshape(n, h)

    # Fallback (N*H not a multiple of 128): tile over the N axis so the
    # pipeline still overlaps DMA-in/DMA-out and the VMEM footprint is bounded
    # regardless of N; the block keeps the full H extent (legal even when H is
    # not 128-aligned because it equals the full array dim).
    # TODO(synk): for very large inputs with H << 128, padding H up to 128 in
    # the wrapper would turn masked partial stores into full-lane vst; skipped
    # here since the extra pad/slice HBM pass costs more than it saves for a
    # pure copy.
    tm = _pick_row_tile(n, h * itemsize, itemsize)
    return pl.pallas_call(
        _copy_kernel,
        out_shape=jax.ShapeDtypeStruct((n, h), x.dtype),
        grid=(pl.cdiv(n, tm),),
        in_specs=[pl.BlockSpec((tm, h), lambda i: (i, 0))],
        out_specs=pl.BlockSpec((tm, h), lambda i: (i, 0)),
        input_output_aliases={0: 0},
        cost_estimate=cost,
        compiler_params=pltpu.CompilerParams(
            dimension_semantics=("parallel",),
        ),
    )(x)


def base_task_head_forward(node_representations, target_edges=None, *,
                           materialize=False):
    """Pallas analogue of BaseTaskHead.forward.

    node_representations: [N, H] float array.
    target_edges: accepted by the interface, unused by the abstract base class.
    materialize: if False (default), the identity is returned directly with no
      kernel launch (zero-cost pass-through). If True, the tiled/pipelined
      Pallas copy runs (the structure a concrete subclass head would reuse).
    """
    del target_edges  # interface-only argument; not consumed by the base class
    if not materialize:
        # Highest-value path: an identity needs no kernel (avoids a full
        # 2*N*H*itemsize-byte HBM round trip for zero compute).
        return node_representations
    return _materialized_identity(node_representations)


if __name__ == "__main__":
    key = jax.random.PRNGKey(0)
    k_nodes, k_edges, k_big, k_rag = jax.random.split(key, 4)

    # Small, deterministic example consistent with the module interface:
    # 16 nodes, hidden size 32, plus an optional [2, E] edge-index tensor.
    num_nodes, hidden = 16, 32
    node_representations = jax.random.normal(
        k_nodes, (num_nodes, hidden), dtype=jnp.float32
    )
    target_edges = jax.random.randint(
        k_edges, (2, 8), minval=0, maxval=num_nodes, dtype=jnp.int32
    )

    # 1) Default (zero-cost) path: no kernel launch.
    out_default = jax.block_until_ready(
        base_task_head_forward(node_representations, target_edges)
    )
    assert out_default.shape == node_representations.shape
    assert jnp.allclose(out_default, node_representations)

    # 2) Materialized path (small input): lane-dense single-block Pallas copy.
    out_kernel = jax.block_until_ready(
        base_task_head_forward(node_representations, target_edges,
                               materialize=True)
    )
    assert out_kernel.shape == node_representations.shape
    assert jnp.allclose(out_kernel, node_representations)

    # 3) Larger case exercising the multi-step pipelined lane-dense grid
    #    (512 * 1024 f32 = 2 MiB -> 4096 lane-rows -> >= 2 grid steps).
    big = jax.random.normal(k_big, (512, 1024), dtype=jnp.float32)
    out_big = jax.block_until_ready(base_task_head_forward(big, materialize=True))
    assert out_big.shape == big.shape
    assert jnp.allclose(out_big, big)

    # 4) Ragged case (N*H not a multiple of 128) exercising the tiled fallback
    #    over the N axis (bounded VMEM, pipelined, >= 2 grid steps).
    ragged = jax.random.normal(k_rag, (200, 100), dtype=jnp.float32)
    out_rag = jax.block_until_ready(
        base_task_head_forward(ragged, materialize=True)
    )
    assert out_rag.shape == ragged.shape
    assert jnp.allclose(out_rag, ragged)

    print("KERNEL_OK")
</pallas_src>

<mosaic_0001>
module attributes {stable_mosaic.version = 11 : i64} {
  func.func @_copy_kernel(%arg0: i32, %arg1: memref<4x128xf32, #tpu.memory_space<vmem>>, %arg2: memref<4x128xf32, #tpu.memory_space<vmem>>) attributes {dimension_semantics = [#tpu.dimension_semantics<parallel>], iteration_bounds = array<i64: 1>, scalar_prefetch = 0 : i64, scratch_operands = 0 : i64, tpu.core_type = #tpu.core_type<tc>, window_params = [{transform_indices = @transform_0, window_bounds = array<i64: 4, 128>}, {transform_indices = @transform_1, window_bounds = array<i64: 4, 128>}]} {
    %c0 = arith.constant 0 : index
    %c0_0 = arith.constant 0 : index
    %0 = vector.load %arg1[%c0, %c0_0] : memref<4x128xf32, #tpu.memory_space<vmem>>, vector<4x128xf32>
    %c0_1 = arith.constant 0 : index
    %c0_2 = arith.constant 0 : index
    %1 = vector.load %arg2[%c0_1, %c0_2] : memref<4x128xf32, #tpu.memory_space<vmem>>, vector<4x128xf32>
    tpu.vector_store %arg2[%c0_1, %c0_2], %0 {strides = array<i32>} : memref<4x128xf32, #tpu.memory_space<vmem>>, vector<4x128xf32>,
    return
  }
  func.func @transform_0(%arg0: i32) -> (i32, i32) {
    %c0_i32 = arith.constant 0 : i32
    %c0_i32_0 = arith.constant 0 : i32
    return %arg0, %c0_i32 : i32, i32
  }
  func.func @transform_1(%arg0: i32) -> (i32, i32) {
    %c0_i32 = arith.constant 0 : i32
    %c0_i32_0 = arith.constant 0 : i32
    return %arg0, %c0_i32 : i32, i32
  }
}

</mosaic_0001>

<llo_original>
// kernel: tpu_custom_call.1
$region0: #{tpu_custom_call.1}
  #allocation0 [shape = 'u32[]', space=smem, size = 0x4, offset = 0x4, fixed_abs, tag = 'smem constant byte address 0x4 - core index']
  #allocation1 [shape = 'u32[144,128]{1,0:T(1,128)}', space=vmem, size = 0x12000, scoped, tag = 'internal scratch']
  %s0 = inlined_call_operand.hbm [shape: f32[4,128], index: 0, kind: input, shape index: {}, may-alias: {0,1}]
  %s1 = inlined_call_operand.hbm [shape: f32[4,128], index: 1, kind: output, shape index: {}, may-alias: {0,1}]
  %s2 = sld [smem:[#allocation0]]
  $region18: #{tpu_custom_call.1} parent=0
    _
  %s4 = ssub.s32 1, %s2
  %s5 = scalar_select 0, %s4, %s2
  $region1: #{tpu_custom_call.1} parent=0
    #allocation2 [shape = 'u8[2048]{0}', space=vmem, size = 0x800, scoped, tag = 'input window, operand 0, single buffered']
    #allocation3 [shape = 's32[1]{0}', space=sflag, size = 0x4, scoped, tag = 'scoped memory for tpu_custom_call.1']
    #allocation4 [shape = 's32[1]{0}', space=sflag, size = 0x4, scoped, tag = 'scoped memory for tpu_custom_call.1']
    #allocation5 [shape = 'u8[2048]{0}', space=vmem, size = 0x800, scoped, tag = 'output window, operand 0, single buffered']
    %6 = vsyncpa [#allocation3], 0
    %7 = vsyncpa [#allocation4], 0
    // Predicated region
    $region2: #{tpu_custom_call.1} parent=1 // pred_check
      _
    $region3: #{tpu_custom_call.1} parent=1 // pred_check_branch
      %9 = sbr.rel (0) target = $region5
    $region4: #{tpu_custom_call.1} parent=1 // pred_region
      %s11 = ssub.s32 64, 64
      %12 = vsyncadd [#allocation3], %s11
      %s14 = sshll.u32 [#allocation2], 4
      %s15 = int_to_ptr.vmem [resolvable:$true] %s14
      %17 = dma.hbm_to_vmem [thread:$0]  %s0, 64, %s15, [#allocation3]
    $region5: #{tpu_custom_call.1} parent=1 // pred_fallthru
      _
    // Predicated region
    $region6: #{tpu_custom_call.1} parent=1 // pred_check
      _
    $region7: #{tpu_custom_call.1} parent=1 // pred_check_branch
      %19 = sbr.rel (0) target = $region9
    $region8: #{tpu_custom_call.1} parent=1 // pred_region
      %20 = dma.done [#allocation3], 64
    $region9: #{tpu_custom_call.1} parent=1 // pred_fallthru
      _
    %v21 = vld [vmem:[#allocation2] sm:$0xf]
    %22 = vst [vmem:[#allocation5] sm:$0xf] %v21
    // Predicated region
    $region10: #{tpu_custom_call.1} parent=1 // pred_check
      _
    $region11: #{tpu_custom_call.1} parent=1 // pred_check_branch
      %24 = sbr.rel (0) target = $region13
    $region12: #{tpu_custom_call.1} parent=1 // pred_region
      %s26 = ssub.s32 64, 64
      %27 = vsyncadd [#allocation4], %s26
      %s29 = sshll.u32 [#allocation5], 4
      %s30 = int_to_ptr.vmem [resolvable:$true] %s29
      %32 = dma.vmem_to_hbm [thread:$0]  %s30, 64, %s1, [#allocation4]
    $region13: #{tpu_custom_call.1} parent=1 // pred_fallthru
      _
    // Predicated region
    $region14: #{tpu_custom_call.1} parent=1 // pred_check
      _
    $region15: #{tpu_custom_call.1} parent=1 // pred_check_branch
      %34 = sbr.rel (0) target = $region17
    $region16: #{tpu_custom_call.1} parent=1 // pred_region
      %35 = dma.done [#allocation4], 64
    $region17: #{tpu_custom_call.1} parent=1 // pred_fallthru
      _
    %36 = vsyncpa [#allocation3], 1
    %37 = vsyncpa [#allocation4], 1

</llo_original>
